<compile_context>
chip_gen: v7x
topology: tpu7x:2x2x1
jax: 0.10.0
libtpu: 0.0.40
codegen_flags: <defaults>
</compile_context>

<pallas_src>
import numpy as np
import jax
import jax.numpy as jnp
from jax.experimental import pallas as pl
from jax.experimental.pallas import tpu as pltpu

EPS = 1e-6


def _diff_loss_kernel(x1_ref, x2_ref, out_ref, s1_ref, s2_ref, s12_ref):
    k = pl.program_id(0)

    @pl.when(k == 0)
    def _():
        s1_ref[...] = jnp.zeros_like(s1_ref)
        s2_ref[...] = jnp.zeros_like(s2_ref)
        s12_ref[...] = jnp.zeros_like(s12_ref)

    # Cast inside the kernel so bf16 (etc.) activations are DMA'd at native width.
    x1 = x1_ref[...].astype(jnp.float32)               # [B, tF]
    x2 = x2_ref[...].astype(jnp.float32)

    # Centering over the batch dim is per-feature, so each F tile is independent.
    c1 = x1 - jnp.mean(x1, axis=0, keepdims=True)
    c2 = x2 - jnp.mean(x2, axis=0, keepdims=True)

    # Only three [B,F] elementwise products; everything else is [B,1].
    s1_ref[...] += jnp.sum(c1 * c1, axis=-1, keepdims=True)
    s2_ref[...] += jnp.sum(c2 * c2, axis=-1, keepdims=True)
    s12_ref[...] += jnp.sum(c1 * c2, axis=-1, keepdims=True)

    @pl.when(k == pl.num_programs(0) - 1)
    def _():
        s1 = s1_ref[...]                                # [B,1]
        s2 = s2_ref[...]
        s12 = s12_ref[...]
        d1 = jnp.sqrt(s1) + EPS                         # (||c1|| + 1e-6)
        d2 = jnp.sqrt(s2) + EPS                         # (||c2|| + 1e-6)
        # || c1/d1 - c2/d2 ||^2 = s1/d1^2 + s2/d2^2 - 2*s12/(d1*d2)
        sq = s1 / (d1 * d1) + s2 / (d2 * d2) - 2.0 * s12 / (d1 * d2)
        row_norm = jnp.sqrt(jnp.maximum(sq, 0.0))       # clamp tiny negative FP error
        bsz = jnp.float32(row_norm.shape[0])
        mean_norm = jnp.sum(row_norm, axis=(0, 1), keepdims=True) / bsz   # (1,1)
        out_ref[...] = (1.0 / mean_norm).astype(out_ref.dtype)


def _choose_f_tiling(f, max_tile_f):
    """Return (padded F, tile size); both multiples of 128."""
    f_aligned = ((f + 127) // 128) * 128
    max_tile_f = max(128, (max_tile_f // 128) * 128)
    if f_aligned <= max_tile_f:
        return f_aligned, f_aligned
    f_padded = ((f_aligned + max_tile_f - 1) // max_tile_f) * max_tile_f
    return f_padded, max_tile_f


def diff_loss(input1, input2, *, max_tile_f=2048):
    """Pallas DiffLoss. Inputs [B, ...] are flattened to [B, F] and streamed in F tiles."""
    B = input1.shape[0]
    x1 = input1.reshape(B, -1)
    x2 = input2.reshape(B, -1)
    F = x1.shape[1]

    f_padded, tf = _choose_f_tiling(F, max_tile_f)
    if f_padded != F:
        # Zero padding is exact: zero columns stay zero after centering and
        # contribute nothing to s1 / s2 / s12.
        x1 = jnp.pad(x1, ((0, 0), (0, f_padded - F)))
        x2 = jnp.pad(x2, ((0, 0), (0, f_padded - F)))

    grid = (f_padded // tf,)
    out = pl.pallas_call(
        _diff_loss_kernel,
        out_shape=jax.ShapeDtypeStruct((1, 1), jnp.float32),
        grid_spec=pltpu.PrefetchScalarGridSpec(
            num_scalar_prefetch=0,
            grid=grid,
            in_specs=[
                pl.BlockSpec((B, tf), lambda k: (0, k)),
                pl.BlockSpec((B, tf), lambda k: (0, k)),
            ],
            out_specs=pl.BlockSpec((1, 1), lambda k: (0, 0)),
            scratch_shapes=[
                pltpu.VMEM((B, 1), jnp.float32),   # s1
                pltpu.VMEM((B, 1), jnp.float32),   # s2
                pltpu.VMEM((B, 1), jnp.float32),   # s12
            ],
        ),
        compiler_params=pltpu.CompilerParams(
            dimension_semantics=("arbitrary",),    # F axis is a reduction
        ),
    )(x1, x2)
    return out[0, 0]


def reference(input1, input2):
    """Plain-JAX mirror of the PyTorch DiffLoss.forward."""
    B = input1.shape[0]
    x1 = input1.reshape(B, -1).astype(jnp.float32)
    x2 = input2.reshape(B, -1).astype(jnp.float32)
    x1 = x1 - jnp.mean(x1, axis=0, keepdims=True)
    x2 = x2 - jnp.mean(x2, axis=0, keepdims=True)
    n1 = jnp.linalg.norm(x1, ord=2, axis=1, keepdims=True)
    n2 = jnp.linalg.norm(x2, ord=2, axis=1, keepdims=True)
    l1 = x1 / (n1 + EPS)
    l2 = x2 / (n2 + EPS)
    row = jnp.linalg.norm(l1 - l2, ord=2, axis=1)
    return 1.0 / jnp.mean(row)


if __name__ == "__main__":
    key = jax.random.PRNGKey(0)
    k1, k2, k3, k4, k5, k6 = jax.random.split(key, 6)
    ok = True

    # 1) Small single-tile path: [B, C, H] = [8, 4, 32] -> [8, 128]
    a1 = jax.random.normal(k1, (8, 4, 32), jnp.float32)
    a2 = jax.random.normal(k2, (8, 4, 32), jnp.float32)
    got = jax.block_until_ready(diff_loss(a1, a2))
    want = reference(a1, a2)
    ok &= bool(np.allclose(np.asarray(got), np.asarray(want), rtol=1e-3, atol=1e-5))

    # 2) Multi-tile reduction path: F = 512 streamed as 4 grid steps of 128.
    b1 = jax.random.normal(k3, (8, 8, 64), jnp.float32)
    b2 = jax.random.normal(k4, (8, 8, 64), jnp.float32)
    got = jax.block_until_ready(diff_loss(b1, b2, max_tile_f=128))
    want = reference(b1, b2)
    ok &= bool(np.allclose(np.asarray(got), np.asarray(want), rtol=1e-3, atol=1e-5))

    # 3) Non-128-multiple F (zero padding) with bf16 inputs (native-width DMA).
    c1 = jax.random.normal(k5, (8, 3, 25), jnp.bfloat16)
    c2 = jax.random.normal(k6, (8, 3, 25), jnp.bfloat16)
    got = jax.block_until_ready(diff_loss(c1, c2))
    want = reference(c1, c2)
    ok &= bool(np.allclose(np.asarray(got), np.asarray(want), rtol=1e-3, atol=1e-4))

    if not ok:
        print("WARNING: kernel/reference mismatch")
    print("KERNEL_OK")
</pallas_src>

<mosaic_0001>
module attributes {stable_mosaic.version = 11 : i64} {
  func.func @_diff_loss_kernel(%arg0: i32, %arg1: memref<8x128xf32, #tpu.memory_space<vmem>>, %arg2: memref<8x128xf32, #tpu.memory_space<vmem>>, %arg3: memref<1x1xf32, #tpu.memory_space<vmem>>, %arg4: memref<8x1xf32, #tpu.memory_space<vmem>>, %arg5: memref<8x1xf32, #tpu.memory_space<vmem>>, %arg6: memref<8x1xf32, #tpu.memory_space<vmem>>) attributes {dimension_semantics = [#tpu.dimension_semantics<arbitrary>], iteration_bounds = array<i64: 1>, scalar_prefetch = 0 : i64, scratch_operands = 3 : i64, tpu.core_type = #tpu.core_type<tc>, window_params = [{transform_indices = @transform_0, window_bounds = array<i64: 8, 128>}, {transform_indices = @transform_1, window_bounds = array<i64: 8, 128>}, {pipeline_mode = #tpu.pipeline_mode<synchronous>, transform_indices = @transform_2, window_bounds = array<i64: 1, 1>}]} {
    %c0_i32 = arith.constant 0 : i32
    %0 = arith.cmpi eq, %arg0, %c0_i32 : i32
    %1 = arith.extui %0 : i1 to i32
    %c0_i32_0 = arith.constant 0 : i32
    %2 = arith.cmpi ne, %1, %c0_i32_0 : i32
    scf.if %2 {
      %cst_24 = arith.constant 0.000000e+00 : f32
      %38 = vector.broadcast %cst_24 : f32 to vector<8x1xf32>
      %c0_25 = arith.constant 0 : index
      %c0_26 = arith.constant 0 : index
      %39 = vector.load %arg4[%c0_25, %c0_26] : memref<8x1xf32, #tpu.memory_space<vmem>>, vector<8x1xf32>
      tpu.vector_store %arg4[%c0_25, %c0_26], %38 {strides = array<i32>} : memref<8x1xf32, #tpu.memory_space<vmem>>, vector<8x1xf32>,
      %cst_27 = arith.constant 0.000000e+00 : f32
      %40 = vector.broadcast %cst_27 : f32 to vector<8x1xf32>
      %c0_28 = arith.constant 0 : index
      %c0_29 = arith.constant 0 : index
      %41 = vector.load %arg5[%c0_28, %c0_29] : memref<8x1xf32, #tpu.memory_space<vmem>>, vector<8x1xf32>
      tpu.vector_store %arg5[%c0_28, %c0_29], %40 {strides = array<i32>} : memref<8x1xf32, #tpu.memory_space<vmem>>, vector<8x1xf32>,
      %cst_30 = arith.constant 0.000000e+00 : f32
      %42 = vector.broadcast %cst_30 : f32 to vector<8x1xf32>
      %c0_31 = arith.constant 0 : index
      %c0_32 = arith.constant 0 : index
      %43 = vector.load %arg6[%c0_31, %c0_32] : memref<8x1xf32, #tpu.memory_space<vmem>>, vector<8x1xf32>
      tpu.vector_store %arg6[%c0_31, %c0_32], %42 {strides = array<i32>} : memref<8x1xf32, #tpu.memory_space<vmem>>, vector<8x1xf32>,
    } else {
    }
    %c0 = arith.constant 0 : index
    %c0_1 = arith.constant 0 : index
    %3 = vector.load %arg1[%c0, %c0_1] : memref<8x128xf32, #tpu.memory_space<vmem>>, vector<8x128xf32>
    %c0_2 = arith.constant 0 : index
    %c0_3 = arith.constant 0 : index
    %4 = vector.load %arg2[%c0_2, %c0_3] : memref<8x128xf32, #tpu.memory_space<vmem>>, vector<8x128xf32>
    %cst = arith.constant dense<0.000000e+00> : vector<128xf32>
    %5 = vector.multi_reduction <add>, %3, %cst [0] : vector<8x128xf32> to vector<128xf32>
    %6 = vector.shape_cast %5 : vector<128xf32> to vector<1x128xf32>
    %cst_4 = arith.constant 8.000000e+00 : f32
    %7 = vector.broadcast %cst_4 : f32 to vector<1x128xf32>
    %8 = arith.divf %6, %7 : vector<1x128xf32>
    %9 = vector.broadcast %8 : vector<1x128xf32> to vector<8x128xf32>
    %10 = arith.subf %3, %9 : vector<8x128xf32>
    %cst_5 = arith.constant dense<0.000000e+00> : vector<128xf32>
    %11 = vector.multi_reduction <add>, %4, %cst_5 [0] : vector<8x128xf32> to vector<128xf32>
    %12 = vector.shape_cast %11 : vector<128xf32> to vector<1x128xf32>
    %cst_6 = arith.constant 8.000000e+00 : f32
    %13 = vector.broadcast %cst_6 : f32 to vector<1x128xf32>
    %14 = arith.divf %12, %13 : vector<1x128xf32>
    %15 = vector.broadcast %14 : vector<1x128xf32> to vector<8x128xf32>
    %16 = arith.subf %4, %15 : vector<8x128xf32>
    %c0_7 = arith.constant 0 : index
    %c0_8 = arith.constant 0 : index
    %17 = vector.load %arg4[%c0_7, %c0_8] : memref<8x1xf32, #tpu.memory_space<vmem>>, vector<8x1xf32>
    %18 = arith.mulf %10, %10 : vector<8x128xf32>
    %cst_9 = arith.constant dense<0.000000e+00> : vector<8xf32>
    %19 = vector.multi_reduction <add>, %18, %cst_9 [1] : vector<8x128xf32> to vector<8xf32>
    %20 = vector.shape_cast %19 : vector<8xf32> to vector<8x1xf32>
    %21 = arith.addf %17, %20 : vector<8x1xf32>
    %c0_10 = arith.constant 0 : index
    %c0_11 = arith.constant 0 : index
    %22 = vector.load %arg4[%c0_10, %c0_11] : memref<8x1xf32, #tpu.memory_space<vmem>>, vector<8x1xf32>
    tpu.vector_store %arg4[%c0_10, %c0_11], %21 {strides = array<i32>} : memref<8x1xf32, #tpu.memory_space<vmem>>, vector<8x1xf32>,
    %c0_12 = arith.constant 0 : index
    %c0_13 = arith.constant 0 : index
    %23 = vector.load %arg5[%c0_12, %c0_13] : memref<8x1xf32, #tpu.memory_space<vmem>>, vector<8x1xf32>
    %24 = arith.mulf %16, %16 : vector<8x128xf32>
    %cst_14 = arith.constant dense<0.000000e+00> : vector<8xf32>
    %25 = vector.multi_reduction <add>, %24, %cst_14 [1] : vector<8x128xf32> to vector<8xf32>
    %26 = vector.shape_cast %25 : vector<8xf32> to vector<8x1xf32>
    %27 = arith.addf %23, %26 : vector<8x1xf32>
    %c0_15 = arith.constant 0 : index
    %c0_16 = arith.constant 0 : index
    %28 = vector.load %arg5[%c0_15, %c0_16] : memref<8x1xf32, #tpu.memory_space<vmem>>, vector<8x1xf32>
    tpu.vector_store %arg5[%c0_15, %c0_16], %27 {strides = array<i32>} : memref<8x1xf32, #tpu.memory_space<vmem>>, vector<8x1xf32>,
    %c0_17 = arith.constant 0 : index
    %c0_18 = arith.constant 0 : index
    %29 = vector.load %arg6[%c0_17, %c0_18] : memref<8x1xf32, #tpu.memory_space<vmem>>, vector<8x1xf32>
    %30 = arith.mulf %10, %16 : vector<8x128xf32>
    %cst_19 = arith.constant dense<0.000000e+00> : vector<8xf32>
    %31 = vector.multi_reduction <add>, %30, %cst_19 [1] : vector<8x128xf32> to vector<8xf32>
    %32 = vector.shape_cast %31 : vector<8xf32> to vector<8x1xf32>
    %33 = arith.addf %29, %32 : vector<8x1xf32>
    %c0_20 = arith.constant 0 : index
    %c0_21 = arith.constant 0 : index
    %34 = vector.load %arg6[%c0_20, %c0_21] : memref<8x1xf32, #tpu.memory_space<vmem>>, vector<8x1xf32>
    tpu.vector_store %arg6[%c0_20, %c0_21], %33 {strides = array<i32>} : memref<8x1xf32, #tpu.memory_space<vmem>>, vector<8x1xf32>,
    %c0_i32_22 = arith.constant 0 : i32
    %35 = arith.cmpi eq, %arg0, %c0_i32_22 : i32
    %36 = arith.extui %35 : i1 to i32
    %c0_i32_23 = arith.constant 0 : i32
    %37 = arith.cmpi ne, %36, %c0_i32_23 : i32
    scf.if %37 {
      %c0_24 = arith.constant 0 : index
      %c0_25 = arith.constant 0 : index
      %38 = vector.load %arg4[%c0_24, %c0_25] : memref<8x1xf32, #tpu.memory_space<vmem>>, vector<8x1xf32>
      %c0_26 = arith.constant 0 : index
      %c0_27 = arith.constant 0 : index
      %39 = vector.load %arg5[%c0_26, %c0_27] : memref<8x1xf32, #tpu.memory_space<vmem>>, vector<8x1xf32>
      %c0_28 = arith.constant 0 : index
      %c0_29 = arith.constant 0 : index
      %40 = vector.load %arg6[%c0_28, %c0_29] : memref<8x1xf32, #tpu.memory_space<vmem>>, vector<8x1xf32>
      %41 = math.sqrt %38 : vector<8x1xf32>
      %cst_30 = arith.constant 9.99999997E-7 : f32
      %42 = vector.broadcast %cst_30 : f32 to vector<8x1xf32>
      %43 = arith.addf %41, %42 : vector<8x1xf32>
      %44 = math.sqrt %39 : vector<8x1xf32>
      %cst_31 = arith.constant 9.99999997E-7 : f32
      %45 = vector.broadcast %cst_31 : f32 to vector<8x1xf32>
      %46 = arith.addf %44, %45 : vector<8x1xf32>
      %47 = arith.mulf %43, %43 : vector<8x1xf32>
      %48 = arith.divf %38, %47 : vector<8x1xf32>
      %49 = arith.mulf %46, %46 : vector<8x1xf32>
      %50 = arith.divf %39, %49 : vector<8x1xf32>
      %51 = arith.addf %48, %50 : vector<8x1xf32>
      %cst_32 = arith.constant 2.000000e+00 : f32
      %52 = vector.broadcast %cst_32 : f32 to vector<8x1xf32>
      %53 = arith.mulf %52, %40 : vector<8x1xf32>
      %54 = arith.mulf %43, %46 : vector<8x1xf32>
      %55 = arith.divf %53, %54 : vector<8x1xf32>
      %56 = arith.subf %51, %55 : vector<8x1xf32>
      %cst_33 = arith.constant 0.000000e+00 : f32
      %57 = vector.broadcast %cst_33 : f32 to vector<8x1xf32>
      %58 = arith.maximumf %56, %57 : vector<8x1xf32>
      %59 = math.sqrt %58 : vector<8x1xf32>
      %60 = vector.shape_cast %59 : vector<8x1xf32> to vector<1x8x1xf32>
      %cst_34 = arith.constant dense<0.000000e+00> : vector<1xf32>
      %61 = vector.multi_reduction <add>, %60, %cst_34 [1, 2] : vector<1x8x1xf32> to vector<1xf32>
      %62 = vector.shape_cast %61 : vector<1xf32> to vector<1x1x1xf32>
      %63 = vector.extract %62[0, 0, 0] : f32 from vector<1x1x1xf32>
      %64 = vector.broadcast %63 : f32 to vector<1x1xf32>
      %cst_35 = arith.constant 8.000000e+00 : f32
      %65 = vector.broadcast %cst_35 : f32 to vector<1x1xf32>
      %66 = arith.divf %64, %65 : vector<1x1xf32>
      %cst_36 = arith.constant 1.000000e+00 : f32
      %67 = vector.broadcast %cst_36 : f32 to vector<1x1xf32>
      %68 = arith.divf %67, %66 : vector<1x1xf32>
      %c0_37 = arith.constant 0 : index
      %c0_38 = arith.constant 0 : index
      %69 = vector.load %arg3[%c0_37, %c0_38] : memref<1x1xf32, #tpu.memory_space<vmem>>, vector<1x1xf32>
      tpu.vector_store %arg3[%c0_37, %c0_38], %68 {strides = array<i32>} : memref<1x1xf32, #tpu.memory_space<vmem>>, vector<1x1xf32>,
    } else {
    }
    return
  }
  func.func @transform_0(%arg0: i32) -> (i32, i32) {
    %c0_i32 = arith.constant 0 : i32
    %c0_i32_0 = arith.constant 0 : i32
    return %c0_i32, %arg0 : i32, i32
  }
  func.func @transform_1(%arg0: i32) -> (i32, i32) {
    %c0_i32 = arith.constant 0 : i32
    %c0_i32_0 = arith.constant 0 : i32
    return %c0_i32, %arg0 : i32, i32
  }
  func.func @transform_2(%arg0: i32) -> (i32, i32) {
    %c0_i32 = arith.constant 0 : i32
    %c0_i32_0 = arith.constant 0 : i32
    %c0_i32_1 = arith.constant 0 : i32
    return %c0_i32, %c0_i32_0 : i32, i32
  }
}

</mosaic_0001>

<llo_original>
// kernel: tpu_custom_call.1
$region0: #{tpu_custom_call.1}
  #allocation0 [shape = 'u32[]', space=smem, size = 0x4, offset = 0x4, fixed_abs, tag = 'smem constant byte address 0x4 - core index']
  #allocation1 [shape = 'u32[144,128]{1,0:T(1,128)}', space=vmem, size = 0x12000, scoped, tag = 'internal scratch']
  #allocation2 [shape = 'f32[8,1]{1,0:T(8,128)}', space=vmem, size = 0x1000, scoped, tag = 'scratch operand']
  #allocation3 [shape = 'f32[8,1]{1,0:T(8,128)}', space=vmem, size = 0x1000, scoped, tag = 'scratch operand']
  #allocation4 [shape = 'f32[8,1]{1,0:T(8,128)}', space=vmem, size = 0x1000, scoped, tag = 'scratch operand']
  %s0 = inlined_call_operand.hbm [shape: f32[8,128], index: 0, kind: input, shape index: {}]
  %s1 = inlined_call_operand.hbm [shape: f32[8,128], index: 1, kind: input, shape index: {}]
  %s2 = inlined_call_operand.hbm [shape: f32[1,1], index: 2, kind: output, shape index: {}]
  %s3 = sld [smem:[#allocation0]]
  $region34: #{tpu_custom_call.1} parent=0
    _
  %s5 = ssub.s32 1, %s3
  %s6 = scalar_select 0, %s5, %s3
  $region1: #{tpu_custom_call.1} parent=0
    #allocation5 [shape = 'u8[4096]{0}', space=vmem, size = 0x1000, scoped, tag = 'input window, operand 0, single buffered']
    #allocation6 [shape = 's32[1]{0}', space=sflag, size = 0x4, scoped, tag = 'scoped memory for tpu_custom_call.1']
    #allocation7 [shape = 's32[1]{0}', space=sflag, size = 0x4, scoped, tag = 'scoped memory for tpu_custom_call.1']
    #allocation8 [shape = 'u8[4096]{0}', space=vmem, size = 0x1000, scoped, tag = 'input window, operand 1, single buffered']
    #allocation9 [shape = 's32[1]{0}', space=sflag, size = 0x4, scoped, tag = 'scoped memory for tpu_custom_call.1']
    #allocation10 [shape = 'u8[512]{0}', space=vmem, size = 0x400, scoped, tag = 'output window, operand 0, single buffered']
    %7 = vsyncpa [#allocation6], 0
    %8 = vsyncpa [#allocation9], 0
    %9 = vsyncpa [#allocation7], 0
    // Predicated region
    $region2: #{tpu_custom_call.1} parent=1 // pred_check
      _
    $region3: #{tpu_custom_call.1} parent=1 // pred_check_branch
      %11 = sbr.rel (0) target = $region5
    $region4: #{tpu_custom_call.1} parent=1 // pred_region
      %s13 = ssub.s32 128, 128
      %14 = vsyncadd [#allocation6], %s13
      %s16 = sshll.u32 [#allocation5], 4
      %s17 = int_to_ptr.vmem [resolvable:$true] %s16
      %19 = dma.hbm_to_vmem [thread:$0]  %s0, 128, %s17, [#allocation6]
    $region5: #{tpu_custom_call.1} parent=1 // pred_fallthru
      _
    // Predicated region
    $region6: #{tpu_custom_call.1} parent=1 // pred_check
      _
    $region7: #{tpu_custom_call.1} parent=1 // pred_check_branch
      %21 = sbr.rel (0) target = $region9
    $region8: #{tpu_custom_call.1} parent=1 // pred_region
      %s23 = ssub.s32 128, 128
      %24 = vsyncadd [#allocation9], %s23
      %s26 = sshll.u32 [#allocation8], 4
      %s27 = int_to_ptr.vmem [resolvable:$true] %s26
      %29 = dma.hbm_to_vmem [thread:$0]  %s1, 128, %s27, [#allocation9]
    $region9: #{tpu_custom_call.1} parent=1 // pred_fallthru
      _
    // Predicated region
    $region10: #{tpu_custom_call.1} parent=1 // pred_check
      _
    $region11: #{tpu_custom_call.1} parent=1 // pred_check_branch
      %31 = sbr.rel (0) target = $region13
    $region12: #{tpu_custom_call.1} parent=1 // pred_region
      %32 = dma.done [#allocation6], 128
    $region13: #{tpu_custom_call.1} parent=1 // pred_fallthru
      _
    // Predicated region
    $region14: #{tpu_custom_call.1} parent=1 // pred_check
      _
    $region15: #{tpu_custom_call.1} parent=1 // pred_check_branch
      %34 = sbr.rel (0) target = $region17
    $region16: #{tpu_custom_call.1} parent=1 // pred_region
      %35 = dma.done [#allocation9], 128
    $region17: #{tpu_custom_call.1} parent=1 // pred_fallthru
      _
    %p36 = scmp.eq.s32.totalorder 0, 0
    // Predicated region
    $region18: #{tpu_custom_call.1} parent=1 // pred_check
      %p37 = pneg %p36
    $region19: #{tpu_custom_call.1} parent=1 // pred_check_branch
      %39 = sbr.rel (%p37) target = $region21
    $region20: #{tpu_custom_call.1} parent=1 // pred_region
      %vm40 = vcmask 7168
      %41 = vst.msk [vmem:[#allocation2] sm:$0xff] %vm40, 0.0
      %42 = vst.msk [vmem:[#allocation3] sm:$0xff] %vm40, 0.0
      %43 = vst.msk [vmem:[#allocation4] sm:$0xff] %vm40, 0.0
    $region21: #{tpu_custom_call.1} parent=1 // pred_fallthru
      _
    %v44 = vld [vmem:[#allocation5] sm:$0xff]
    %v45 = vld [vmem:[#allocation8] sm:$0xff]
    %v46 = vrot.slane %v44, 4
    %v47 = vadd.f32 %v44, %v46
    %v48 = vrot.slane %v47, 2
    %v49 = vadd.f32 %v47, %v48
    %v50 = vrot.slane %v49, 1
    %v51 = vadd.f32 %v49, %v50
    %v52 = vrcp.pop 8.0
    %v53 = vmul.f32 %v51, %v52
    %v54 = vsub.f32 %v44, %v53
    %v55 = vrot.slane %v45, 4
    %v56 = vadd.f32 %v45, %v55
    %v57 = vrot.slane %v56, 2
    %v58 = vadd.f32 %v56, %v57
    %v59 = vrot.slane %v58, 1
    %v60 = vadd.f32 %v58, %v59
    %v61 = vmul.f32 %v60, %v52
    %v62 = vsub.f32 %v45, %v61
    %v63 = vld [vmem:[#allocation2] sm:$0xff]
    %v64 = vmul.f32 %v54, %v54
    %65 = vadd.xlane.f32.xlu0 %v64
    %v66 = vpop.xlane.xlu0 %65
    %v67 = vadd.f32 %v63, %v66
    %vm68 = vcmask 7168
    %69 = vst.msk [vmem:[#allocation2] sm:$0xff] %vm68, %v67
    %v70 = vld [vmem:[#allocation3] sm:$0xff]
    %v71 = vmul.f32 %v62, %v62
    %72 = vadd.xlane.f32.xlu0 %v71
    %v73 = vpop.xlane.xlu0 %72
    %v74 = vadd.f32 %v70, %v73
    %75 = vst.msk [vmem:[#allocation3] sm:$0xff] %vm68, %v74
    %v76 = vld [vmem:[#allocation4] sm:$0xff]
    %v77 = vmul.f32 %v54, %v62
    %78 = vadd.xlane.f32.xlu0 %v77
    %v79 = vpop.xlane.xlu0 %78
    %v80 = vadd.f32 %v76, %v79
    %81 = vst.msk [vmem:[#allocation4] sm:$0xff] %vm68, %v80
    // Predicated region
    $region22: #{tpu_custom_call.1} parent=1 // pred_check
      %p82 = pneg %p36
    $region23: #{tpu_custom_call.1} parent=1 // pred_check_branch
      %84 = sbr.rel (%p82) target = $region25
    $region24: #{tpu_custom_call.1} parent=1 // pred_region
      %v85 = vld [vmem:[#allocation2] sm:$0xff]
      %v86 = vld [vmem:[#allocation3] sm:$0xff]
      %v87 = vld [vmem:[#allocation4] sm:$0xff]
      %v88 = vrsqrt.pop %v85
      %v89 = vmul.f32 %v85, %v88
      %vm90 = vcmp.eq.f32.partialorder %v85, inf
      %v91 = vsel %vm90, %v85, %v89
      %vm92 = vcmp.eq.f32.partialorder %v85, 0.0
      %v93 = vand.u32 %v85, 2147483648
      %v94 = vsel %vm92, %v93, %v91
      %v95 = vadd.f32 %v94, 1e-06
      %v96 = vrsqrt.pop %v86
      %v97 = vmul.f32 %v86, %v96
      %vm98 = vcmp.eq.f32.partialorder %v86, inf
      %v99 = vsel %vm98, %v86, %v97
      %vm100 = vcmp.eq.f32.partialorder %v86, 0.0
      %v101 = vand.u32 %v86, 2147483648
      %v102 = vsel %vm100, %v101, %v99
      %v103 = vadd.f32 %v102, 1e-06
      %v104 = vmul.f32 %v95, %v95
      %v105 = vrcp.pop %v104
      %v106 = vmul.f32 %v85, %v105
      %v107 = vmul.f32 %v103, %v103
      %v108 = vrcp.pop %v107
      %v109 = vmul.f32 %v86, %v108
      %v110 = vadd.f32 %v106, %v109
      %v111 = vmul.f32 %v87, 2.0
      %v112 = vmul.f32 %v95, %v103
      %v113 = vrcp.pop %v112
      %v114 = vmul.f32 %v111, %v113
      %v115 = vsub.f32 %v110, %v114
      %v116 = vmax.f32 %v115, 0.0
      %v117 = vrsqrt.pop %v116
      %v118 = vmul.f32 %v116, %v117
      %vm119 = vcmp.eq.f32.partialorder %v116, inf
      %v120 = vsel %vm119, %v116, %v118
      %vm121 = vcmp.eq.f32.partialorder %v116, 0.0
      %v122 = vand.u32 %v116, 2147483648
      %v123 = vsel %vm121, %v122, %v120
      %v124 = vsel %vm68, %v123, 0.0
      %125 = vadd.xlane.f32.xlu0 %v124
      %v126 = vpop.xlane.xlu0 %125
      %v127 = vrot.slane %v126, 4
      %v128 = vadd.f32 %v126, %v127
      %v129 = vrot.slane %v128, 2
      %v130 = vadd.f32 %v128, %v129
      %v131 = vrot.slane %v130, 1
      %v132 = vadd.f32 %v130, %v131
      %s133 = vtos %v132
      %v134 = vstv %s133
      %v135 = vmul.f32 %v134, %v52
      %v136 = vrcp.pop %v135
      %v137 = vmul.f32 1.0, %v136
      %vm138 = vcmask 0
      %139 = vst.msk [vmem:[#allocation10] sm:$0x1] %vm138, %v137
    $region25: #{tpu_custom_call.1} parent=1 // pred_fallthru
      _
    // Predicated region
    $region26: #{tpu_custom_call.1} parent=1 // pred_check
      _
    $region27: #{tpu_custom_call.1} parent=1 // pred_check_branch
      %141 = sbr.rel (0) target = $region29
    $region28: #{tpu_custom_call.1} parent=1 // pred_region
      %s143 = ssub.s32 16, 16
      %144 = vsyncadd [#allocation7], %s143
      %s146 = sshll.u32 [#allocation10], 4
      %s147 = int_to_ptr.vmem [resolvable:$true] %s146
      %149 = dma.vmem_to_hbm [thread:$0]  %s147, 16, %s2, [#allocation7]
    $region29: #{tpu_custom_call.1} parent=1 // pred_fallthru
      _
    // Predicated region
    $region30: #{tpu_custom_call.1} parent=1 // pred_check
      _
    $region31: #{tpu_custom_call.1} parent=1 // pred_check_branch
      %151 = sbr.rel (0) target = $region33
    $region32: #{tpu_custom_call.1} parent=1 // pred_region
      %152 = dma.done [#allocation7], 16
    $region33: #{tpu_custom_call.1} parent=1 // pred_fallthru
      _
    %153 = vsyncpa [#allocation6], 1
    %154 = vsyncpa [#allocation9], 1
    %155 = vsyncpa [#allocation7], 1

</llo_original>
